<compile_context>
chip_gen: v5e
topology: v5e:2x2
jax: 0.10.0
libtpu: 0.0.40
codegen_flags: <defaults>
</compile_context>

<pallas_src>
import functools

import jax
import jax.numpy as jnp
from jax.experimental import pallas as pl
from jax.experimental.pallas import tpu as pltpu

_SUBLANE = 8


def _round_up(n, m):
    return ((n + m - 1) // m) * m


def _vmem_cap_bytes():
    """Per-generation cap for vmem_limit_bytes (v7x has only 64 MiB VMEM)."""
    try:
        kind = jax.devices()[0].device_kind.lower()
    except Exception:
        kind = ""
    if "v5" in kind or "v6" in kind:
        return 100 * 1024 * 1024      # 128 MiB physical on v5e/v6e
    return 56 * 1024 * 1024           # safe on v7x (64 MiB physical)


def _sigmoid(y):
    # exact logistic; values here are small so the naive form is stable.
    # (pl.reciprocal(1 + exp(-y), approx=True) would move the divide to the EUP.)
    return 1.0 / (1.0 + jnp.exp(-y))


def autoencoder_kernel(x_ref,
                       w1_ref, b1_ref,
                       w2_ref, b2_ref,
                       w3_ref, b3_ref,
                       w4_ref, b4_ref,
                       out_ref):
    cdt = w1_ref.dtype                      # matmul input dtype (f32 or bf16)
    x = x_ref[...].astype(cdt)              # cast once per tile (no-op for f32)

    # encoder hidden: Linear(D -> 32) + ReLU
    h = jnp.dot(x, w1_ref[...], preferred_element_type=jnp.float32) + b1_ref[...]
    h = jnp.maximum(h, 0.0)

    # encoder output: Linear(32 -> F) + Sigmoid
    code = jnp.dot(h.astype(cdt), w2_ref[...],
                   preferred_element_type=jnp.float32) + b2_ref[...]
    code = _sigmoid(code)

    # decoder hidden: Linear(F -> 32) + ReLU
    d = jnp.dot(code.astype(cdt), w3_ref[...],
                preferred_element_type=jnp.float32) + b3_ref[...]
    d = jnp.maximum(d, 0.0)

    # decoder output: Linear(32 -> D) + Sigmoid
    y = jnp.dot(d.astype(cdt), w4_ref[...],
                preferred_element_type=jnp.float32) + b4_ref[...]
    out_ref[...] = _sigmoid(y).astype(out_ref.dtype)


def autoencoder_forward(x, params, *, block_batch=512, compute_dtype=jnp.float32):
    """x: [B, D_in] float32. params: unpadded [in, out]-layout weights/biases.

    compute_dtype=jnp.bfloat16 is recommended on v6e/v7x (relax tolerance to
    ~1e-2); keep float32 on v5e and when bitwise-close results are needed.
    """
    B, D_in = x.shape
    w1 = params["w1"].astype(compute_dtype); b1 = params["b1"].astype(jnp.float32)
    w2 = params["w2"].astype(compute_dtype); b2 = params["b2"].astype(jnp.float32)
    w3 = params["w3"].astype(compute_dtype); b3 = params["b3"].astype(jnp.float32)
    w4 = params["w4"].astype(compute_dtype); b4 = params["b4"].astype(jnp.float32)
    H = w1.shape[1]
    F = w2.shape[1]
    assert w1.shape[0] == D_in and w4.shape[1] == D_in
    assert w2.shape[0] == H and w3.shape == (F, H) and w4.shape[0] == H

    # --- batch tile selection ------------------------------------------------
    # multiple of 8 (sublane), no larger than the (rounded) batch, and capped so
    # the grid has >=2 steps when the batch allows it (v7x megacore sharding).
    TB = _round_up(max(_SUBLANE, int(block_batch)), _SUBLANE)
    TB = min(TB, _round_up(B, _SUBLANE))
    if B >= 2 * _SUBLANE:
        TB = min(TB, _round_up(pl.cdiv(B, 2), _SUBLANE))
    grid = (pl.cdiv(B, TB),)

    # --- cost / VMEM bookkeeping ---------------------------------------------
    itemsize = jnp.dtype(x.dtype).itemsize
    param_bytes = sum(int(a.size) * jnp.dtype(a.dtype).itemsize
                      for a in (w1, b1, w2, b2, w3, b3, w4, b4))
    cost = pl.CostEstimate(
        flops=2 * B * (D_in * H + H * F + F * H + H * D_in),
        transcendentals=B * (F + D_in),                 # exp in the two sigmoids
        bytes_accessed=2 * B * D_in * itemsize + param_bytes,
    )
    # double-buffered x/out tiles + resident params (counted x2 to be safe)
    # + f32 intermediates + headroom, capped per chip generation.
    act_bytes = TB * max(D_in, H, F) * 4
    vmem_need = (2 * 2 * TB * D_in * itemsize) + 2 * param_bytes + 8 * act_bytes + (2 << 20)
    vmem_limit = int(min(max(vmem_need, 16 * 1024 * 1024), _vmem_cap_bytes()))

    def resident(a):  # whole array, same block every grid step -> stays in VMEM
        return pl.BlockSpec(a.shape, lambda i: (0, 0))

    return pl.pallas_call(
        autoencoder_kernel,
        out_shape=jax.ShapeDtypeStruct((B, D_in), x.dtype),
        grid=grid,
        in_specs=[
            pl.BlockSpec((TB, D_in), lambda i: (i, 0)),   # x tile, pipelined
            resident(w1), resident(b1),
            resident(w2), resident(b2),
            resident(w3), resident(b3),
            resident(w4), resident(b4),
        ],
        out_specs=pl.BlockSpec((TB, D_in), lambda i: (i, 0)),
        compiler_params=pltpu.CompilerParams(
            dimension_semantics=("parallel",),            # megacore on v7x
            vmem_limit_bytes=vmem_limit,
        ),
        cost_estimate=cost,
    )(x, w1, b1, w2, b2, w3, b3, w4, b4)


def init_params(key, input_shape, features, hidden=32):
    """Deterministic PyTorch-nn.Linear-style init, [in, out] layout."""
    def linear(k, fan_in, fan_out):
        kw, kb = jax.random.split(k)
        bound = 1.0 / jnp.sqrt(fan_in)
        w = jax.random.uniform(kw, (fan_in, fan_out), jnp.float32, -bound, bound)
        b = jax.random.uniform(kb, (1, fan_out), jnp.float32, -bound, bound)
        return w, b

    k1, k2, k3, k4 = jax.random.split(key, 4)
    w1, b1 = linear(k1, input_shape, hidden)
    w2, b2 = linear(k2, hidden, features)
    w3, b3 = linear(k3, features, hidden)
    w4, b4 = linear(k4, hidden, input_shape)
    return {"w1": w1, "b1": b1, "w2": w2, "b2": b2,
            "w3": w3, "b3": b3, "w4": w4, "b4": b4}


def reference_forward(x, p):
    dot = functools.partial(jnp.dot, precision=jax.lax.Precision.HIGHEST)
    h = jnp.maximum(dot(x, p["w1"]) + p["b1"], 0.0)
    code = jax.nn.sigmoid(dot(h, p["w2"]) + p["b2"])
    d = jnp.maximum(dot(code, p["w3"]) + p["b3"], 0.0)
    return jax.nn.sigmoid(dot(d, p["w4"]) + p["b4"])


if __name__ == "__main__":
    key = jax.random.PRNGKey(0)
    k_x, k_p = jax.random.split(key)

    B = 8              # small demo batch
    INPUT_SHAPE = 64   # kwargs['input_shape']
    FEATURES = 16      # kwargs['features']

    x = jax.random.normal(k_x, (B, INPUT_SHAPE), jnp.float32)
    params = init_params(k_p, INPUT_SHAPE, FEATURES)

    # f32 compute keeps the tight match with the reference; on v6e/v7x pass
    # compute_dtype=jnp.bfloat16 and relax tolerance to ~1e-2.
    out = autoencoder_forward(x, params, block_batch=512,
                              compute_dtype=jnp.float32)
    out = jax.block_until_ready(out)

    ref = reference_forward(x, params)
    assert out.shape == (B, INPUT_SHAPE)
    err = float(jnp.max(jnp.abs(out - ref)))
    assert err < 1e-4, err

    print("KERNEL_OK")
</pallas_src>

<mosaic_0001>
module attributes {stable_mosaic.version = 11 : i64} {
  func.func @autoencoder_kernel(%arg0: i32, %arg1: memref<8x64xf32, #tpu.memory_space<vmem>>, %arg2: memref<64x32xf32, #tpu.memory_space<vmem>>, %arg3: memref<1x32xf32, #tpu.memory_space<vmem>>, %arg4: memref<32x16xf32, #tpu.memory_space<vmem>>, %arg5: memref<1x16xf32, #tpu.memory_space<vmem>>, %arg6: memref<16x32xf32, #tpu.memory_space<vmem>>, %arg7: memref<1x32xf32, #tpu.memory_space<vmem>>, %arg8: memref<32x64xf32, #tpu.memory_space<vmem>>, %arg9: memref<1x64xf32, #tpu.memory_space<vmem>>, %arg10: memref<8x64xf32, #tpu.memory_space<vmem>>) attributes {dimension_semantics = [#tpu.dimension_semantics<parallel>], iteration_bounds = array<i64: 1>, scalar_prefetch = 0 : i64, scratch_operands = 0 : i64, tpu.core_type = #tpu.core_type<tc>, window_params = [{transform_indices = @transform_0, window_bounds = array<i64: 8, 64>}, {pipeline_mode = #tpu.pipeline_mode<synchronous>, transform_indices = @transform_1, window_bounds = array<i64: 64, 32>}, {pipeline_mode = #tpu.pipeline_mode<synchronous>, transform_indices = @transform_2, window_bounds = array<i64: 1, 32>}, {pipeline_mode = #tpu.pipeline_mode<synchronous>, transform_indices = @transform_3, window_bounds = array<i64: 32, 16>}, {pipeline_mode = #tpu.pipeline_mode<synchronous>, transform_indices = @transform_4, window_bounds = array<i64: 1, 16>}, {pipeline_mode = #tpu.pipeline_mode<synchronous>, transform_indices = @transform_5, window_bounds = array<i64: 16, 32>}, {pipeline_mode = #tpu.pipeline_mode<synchronous>, transform_indices = @transform_6, window_bounds = array<i64: 1, 32>}, {pipeline_mode = #tpu.pipeline_mode<synchronous>, transform_indices = @transform_7, window_bounds = array<i64: 32, 64>}, {pipeline_mode = #tpu.pipeline_mode<synchronous>, transform_indices = @transform_8, window_bounds = array<i64: 1, 64>}, {transform_indices = @transform_9, window_bounds = array<i64: 8, 64>}]} {
    %c0 = arith.constant 0 : index
    %c0_0 = arith.constant 0 : index
    %0 = vector.load %arg1[%c0, %c0_0] : memref<8x64xf32, #tpu.memory_space<vmem>>, vector<8x64xf32>
    %c0_1 = arith.constant 0 : index
    %c0_2 = arith.constant 0 : index
    %1 = vector.load %arg2[%c0_1, %c0_2] : memref<64x32xf32, #tpu.memory_space<vmem>>, vector<64x32xf32>
    %cst = arith.constant dense<0.000000e+00> : vector<8x32xf32>
    %2 = tpu.matmul %0, %1, %cst {dimension_numbers = #tpu.dot_dimension_numbers<[1], [0], [0], [1], [0, 0, 1, 1], [], []>} : vector<8x64xf32>, vector<64x32xf32>, vector<8x32xf32> -> vector<8x32xf32>
    %c0_3 = arith.constant 0 : index
    %c0_4 = arith.constant 0 : index
    %3 = vector.load %arg3[%c0_3, %c0_4] : memref<1x32xf32, #tpu.memory_space<vmem>>, vector<1x32xf32>
    %4 = vector.broadcast %3 : vector<1x32xf32> to vector<8x32xf32>
    %5 = arith.addf %2, %4 : vector<8x32xf32>
    %cst_5 = arith.constant 0.000000e+00 : f32
    %6 = vector.broadcast %cst_5 : f32 to vector<8x32xf32>
    %7 = arith.maximumf %5, %6 : vector<8x32xf32>
    %c0_6 = arith.constant 0 : index
    %c0_7 = arith.constant 0 : index
    %8 = vector.load %arg4[%c0_6, %c0_7] : memref<32x16xf32, #tpu.memory_space<vmem>>, vector<32x16xf32>
    %cst_8 = arith.constant dense<0.000000e+00> : vector<8x16xf32>
    %9 = tpu.matmul %7, %8, %cst_8 {dimension_numbers = #tpu.dot_dimension_numbers<[1], [0], [0], [1], [0, 0, 1, 1], [], []>} : vector<8x32xf32>, vector<32x16xf32>, vector<8x16xf32> -> vector<8x16xf32>
    %c0_9 = arith.constant 0 : index
    %c0_10 = arith.constant 0 : index
    %10 = vector.load %arg5[%c0_9, %c0_10] : memref<1x16xf32, #tpu.memory_space<vmem>>, vector<1x16xf32>
    %11 = vector.broadcast %10 : vector<1x16xf32> to vector<8x16xf32>
    %12 = arith.addf %9, %11 : vector<8x16xf32>
    %cst_11 = arith.constant 0.000000e+00 : f32
    %13 = vector.broadcast %cst_11 : f32 to vector<8x16xf32>
    %14 = arith.subf %13, %12 : vector<8x16xf32>
    %15 = math.exp %14 : vector<8x16xf32>
    %cst_12 = arith.constant 1.000000e+00 : f32
    %16 = vector.broadcast %cst_12 : f32 to vector<8x16xf32>
    %17 = arith.addf %16, %15 : vector<8x16xf32>
    %cst_13 = arith.constant 1.000000e+00 : f32
    %18 = vector.broadcast %cst_13 : f32 to vector<8x16xf32>
    %19 = arith.divf %18, %17 : vector<8x16xf32>
    %c0_14 = arith.constant 0 : index
    %c0_15 = arith.constant 0 : index
    %20 = vector.load %arg6[%c0_14, %c0_15] : memref<16x32xf32, #tpu.memory_space<vmem>>, vector<16x32xf32>
    %cst_16 = arith.constant dense<0.000000e+00> : vector<8x32xf32>
    %21 = tpu.matmul %19, %20, %cst_16 {dimension_numbers = #tpu.dot_dimension_numbers<[1], [0], [0], [1], [0, 0, 1, 1], [], []>} : vector<8x16xf32>, vector<16x32xf32>, vector<8x32xf32> -> vector<8x32xf32>
    %c0_17 = arith.constant 0 : index
    %c0_18 = arith.constant 0 : index
    %22 = vector.load %arg7[%c0_17, %c0_18] : memref<1x32xf32, #tpu.memory_space<vmem>>, vector<1x32xf32>
    %23 = vector.broadcast %22 : vector<1x32xf32> to vector<8x32xf32>
    %24 = arith.addf %21, %23 : vector<8x32xf32>
    %cst_19 = arith.constant 0.000000e+00 : f32
    %25 = vector.broadcast %cst_19 : f32 to vector<8x32xf32>
    %26 = arith.maximumf %24, %25 : vector<8x32xf32>
    %c0_20 = arith.constant 0 : index
    %c0_21 = arith.constant 0 : index
    %27 = vector.load %arg8[%c0_20, %c0_21] : memref<32x64xf32, #tpu.memory_space<vmem>>, vector<32x64xf32>
    %cst_22 = arith.constant dense<0.000000e+00> : vector<8x64xf32>
    %28 = tpu.matmul %26, %27, %cst_22 {dimension_numbers = #tpu.dot_dimension_numbers<[1], [0], [0], [1], [0, 0, 1, 1], [], []>} : vector<8x32xf32>, vector<32x64xf32>, vector<8x64xf32> -> vector<8x64xf32>
    %c0_23 = arith.constant 0 : index
    %c0_24 = arith.constant 0 : index
    %29 = vector.load %arg9[%c0_23, %c0_24] : memref<1x64xf32, #tpu.memory_space<vmem>>, vector<1x64xf32>
    %30 = vector.broadcast %29 : vector<1x64xf32> to vector<8x64xf32>
    %31 = arith.addf %28, %30 : vector<8x64xf32>
    %cst_25 = arith.constant 0.000000e+00 : f32
    %32 = vector.broadcast %cst_25 : f32 to vector<8x64xf32>
    %33 = arith.subf %32, %31 : vector<8x64xf32>
    %34 = math.exp %33 : vector<8x64xf32>
    %cst_26 = arith.constant 1.000000e+00 : f32
    %35 = vector.broadcast %cst_26 : f32 to vector<8x64xf32>
    %36 = arith.addf %35, %34 : vector<8x64xf32>
    %cst_27 = arith.constant 1.000000e+00 : f32
    %37 = vector.broadcast %cst_27 : f32 to vector<8x64xf32>
    %38 = arith.divf %37, %36 : vector<8x64xf32>
    %c0_28 = arith.constant 0 : index
    %c0_29 = arith.constant 0 : index
    %39 = vector.load %arg10[%c0_28, %c0_29] : memref<8x64xf32, #tpu.memory_space<vmem>>, vector<8x64xf32>
    tpu.vector_store %arg10[%c0_28, %c0_29], %38 {strides = array<i32>} : memref<8x64xf32, #tpu.memory_space<vmem>>, vector<8x64xf32>,
    return
  }
  func.func @transform_0(%arg0: i32) -> (i32, i32) {
    %c0_i32 = arith.constant 0 : i32
    %c0_i32_0 = arith.constant 0 : i32
    return %arg0, %c0_i32 : i32, i32
  }
  func.func @transform_1(%arg0: i32) -> (i32, i32) {
    %c0_i32 = arith.constant 0 : i32
    %c0_i32_0 = arith.constant 0 : i32
    %c0_i32_1 = arith.constant 0 : i32
    return %c0_i32, %c0_i32_0 : i32, i32
  }
  func.func @transform_2(%arg0: i32) -> (i32, i32) {
    %c0_i32 = arith.constant 0 : i32
    %c0_i32_0 = arith.constant 0 : i32
    %c0_i32_1 = arith.constant 0 : i32
    return %c0_i32, %c0_i32_0 : i32, i32
  }
  func.func @transform_3(%arg0: i32) -> (i32, i32) {
    %c0_i32 = arith.constant 0 : i32
    %c0_i32_0 = arith.constant 0 : i32
    %c0_i32_1 = arith.constant 0 : i32
    return %c0_i32, %c0_i32_0 : i32, i32
  }
  func.func @transform_4(%arg0: i32) -> (i32, i32) {
    %c0_i32 = arith.constant 0 : i32
    %c0_i32_0 = arith.constant 0 : i32
    %c0_i32_1 = arith.constant 0 : i32
    return %c0_i32, %c0_i32_0 : i32, i32
  }
  func.func @transform_5(%arg0: i32) -> (i32, i32) {
    %c0_i32 = arith.constant 0 : i32
    %c0_i32_0 = arith.constant 0 : i32
    %c0_i32_1 = arith.constant 0 : i32
    return %c0_i32, %c0_i32_0 : i32, i32
  }
  func.func @transform_6(%arg0: i32) -> (i32, i32) {
    %c0_i32 = arith.constant 0 : i32
    %c0_i32_0 = arith.constant 0 : i32
    %c0_i32_1 = arith.constant 0 : i32
    return %c0_i32, %c0_i32_0 : i32, i32
  }
  func.func @transform_7(%arg0: i32) -> (i32, i32) {
    %c0_i32 = arith.constant 0 : i32
    %c0_i32_0 = arith.constant 0 : i32
    %c0_i32_1 = arith.constant 0 : i32
    return %c0_i32, %c0_i32_0 : i32, i32
  }
  func.func @transform_8(%arg0: i32) -> (i32, i32) {
    %c0_i32 = arith.constant 0 : i32
    %c0_i32_0 = arith.constant 0 : i32
    %c0_i32_1 = arith.constant 0 : i32
    return %c0_i32, %c0_i32_0 : i32, i32
  }
  func.func @transform_9(%arg0: i32) -> (i32, i32) {
    %c0_i32 = arith.constant 0 : i32
    %c0_i32_0 = arith.constant 0 : i32
    return %arg0, %c0_i32 : i32, i32
  }
}

</mosaic_0001>

<llo_original>
// kernel: tpu_custom_call.1
$region0: #{tpu_custom_call.1}
  #allocation0 [shape = 'u32[]', space=smem, size = 0x4, offset = 0x4, fixed_abs, tag = 'smem constant byte address 0x4 - core index']
  #allocation1 [shape = 'u32[72,128]{1,0:T(1,128)}', space=vmem, size = 0x9000, scoped, tag = 'internal scratch']
  %s0 = inlined_call_operand.vmem [shape: f32[8,64], index: 0, kind: input, shape index: {}]
  %s1 = inlined_call_operand.vmem [shape: f32[64,32], index: 1, kind: input, shape index: {}]
  %s2 = inlined_call_operand.vmem [shape: f32[1,32], index: 2, kind: input, shape index: {}]
  %s3 = inlined_call_operand.vmem [shape: f32[32,16], index: 3, kind: input, shape index: {}]
  %s4 = inlined_call_operand.vmem [shape: f32[1,16], index: 4, kind: input, shape index: {}]
  %s5 = inlined_call_operand.vmem [shape: f32[16,32], index: 5, kind: input, shape index: {}]
  %s6 = inlined_call_operand.vmem [shape: f32[1,32], index: 6, kind: input, shape index: {}]
  %s7 = inlined_call_operand.vmem [shape: f32[32,64], index: 7, kind: input, shape index: {}]
  %s8 = inlined_call_operand.vmem [shape: f32[1,64], index: 8, kind: input, shape index: {}]
  %s9 = inlined_call_operand.hbm [shape: f32[8,64], index: 9, kind: output, shape index: {}]
  %s10 = sld [smem:[#allocation0]]
  $region46: #{tpu_custom_call.1} parent=0
    _
  %s12 = ssub.s32 1, %s10
  %s13 = scalar_select 0, %s12, %s10
  $region1: #{tpu_custom_call.1} parent=0
    #allocation2 [shape = 'u8[4096]{0}', space=vmem, size = 0x1000, scoped, tag = 'output window, operand 0, single buffered']
    #allocation3 [shape = 's32[1]{0}', space=sflag, size = 0x4, scoped, tag = 'scoped memory for tpu_custom_call.1']
    %14 = vsyncpa [#allocation3], 0
    // Predicated region
    $region2: #{tpu_custom_call.1} parent=1 // pred_check
      _
    $region3: #{tpu_custom_call.1} parent=1 // pred_check_branch
      %16 = sbr.rel (0) target = $region5
    $region4: #{tpu_custom_call.1} parent=1 // pred_region
      _
    $region5: #{tpu_custom_call.1} parent=1 // pred_fallthru
      _
    // Predicated region
    $region6: #{tpu_custom_call.1} parent=1 // pred_check
      _
    $region7: #{tpu_custom_call.1} parent=1 // pred_check_branch
      %18 = sbr.rel (0) target = $region9
    $region8: #{tpu_custom_call.1} parent=1 // pred_region
      _
    $region9: #{tpu_custom_call.1} parent=1 // pred_fallthru
      _
    // Predicated region
    $region10: #{tpu_custom_call.1} parent=1 // pred_check
      _
    $region11: #{tpu_custom_call.1} parent=1 // pred_check_branch
      %20 = sbr.rel (0) target = $region13
    $region12: #{tpu_custom_call.1} parent=1 // pred_region
      _
    $region13: #{tpu_custom_call.1} parent=1 // pred_fallthru
      _
    // Predicated region
    $region14: #{tpu_custom_call.1} parent=1 // pred_check
      _
    $region15: #{tpu_custom_call.1} parent=1 // pred_check_branch
      %22 = sbr.rel (0) target = $region17
    $region16: #{tpu_custom_call.1} parent=1 // pred_region
      _
    $region17: #{tpu_custom_call.1} parent=1 // pred_fallthru
      _
    // Predicated region
    $region18: #{tpu_custom_call.1} parent=1 // pred_check
      _
    $region19: #{tpu_custom_call.1} parent=1 // pred_check_branch
      %24 = sbr.rel (0) target = $region21
    $region20: #{tpu_custom_call.1} parent=1 // pred_region
      _
    $region21: #{tpu_custom_call.1} parent=1 // pred_fallthru
      _
    // Predicated region
    $region22: #{tpu_custom_call.1} parent=1 // pred_check
      _
    $region23: #{tpu_custom_call.1} parent=1 // pred_check_branch
      %26 = sbr.rel (0) target = $region25
    $region24: #{tpu_custom_call.1} parent=1 // pred_region
      _
    $region25: #{tpu_custom_call.1} parent=1 // pred_fallthru
      _
    // Predicated region
    $region26: #{tpu_custom_call.1} parent=1 // pred_check
      _
    $region27: #{tpu_custom_call.1} parent=1 // pred_check_branch
      %28 = sbr.rel (0) target = $region29
    $region28: #{tpu_custom_call.1} parent=1 // pred_region
      _
    $region29: #{tpu_custom_call.1} parent=1 // pred_fallthru
      _
    // Predicated region
    $region30: #{tpu_custom_call.1} parent=1 // pred_check
      _
    $region31: #{tpu_custom_call.1} parent=1 // pred_check_branch
      %30 = sbr.rel (0) target = $region33
    $region32: #{tpu_custom_call.1} parent=1 // pred_region
      _
    $region33: #{tpu_custom_call.1} parent=1 // pred_fallthru
      _
    // Predicated region
    $region34: #{tpu_custom_call.1} parent=1 // pred_check
      _
    $region35: #{tpu_custom_call.1} parent=1 // pred_check_branch
      %32 = sbr.rel (0) target = $region37
    $region36: #{tpu_custom_call.1} parent=1 // pred_region
      _
    $region37: #{tpu_custom_call.1} parent=1 // pred_fallthru
      _
    %v33 = vld [vmem:[%s0] sm:$0xff]
    %v34 = vld [vmem:[%s1] sm:$0xff]
    %v35 = vld [vmem:[%s1 + $0x8] sm:$0xff]
    %v36 = vld [vmem:[%s1 + $0x10] sm:$0xff]
    %v37 = vld [vmem:[%s1 + $0x18] sm:$0xff]
    %v38 = vld [vmem:[%s1 + $0x20] sm:$0xff]
    %v39 = vld [vmem:[%s1 + $0x28] sm:$0xff]
    %v40 = vld [vmem:[%s1 + $0x30] sm:$0xff]
    %v41 = vld [vmem:[%s1 + $0x38] sm:$0xff]
    %v42 = vld [vmem:[%s2] sm:$0x1]
    %v44 = vperm.slane %v42, 0
    %vm46 = vcmask 523264
    %v48 = vsel %vm46, %v33, 0
    %50 = vmatpush.msra.mxu0 0.0
    %51 = vmatpush.msra.mxu0 0.0
    %52 = vmatpush.msra.mxu0 0.0
    %53 = vmatpush.msra.mxu0 0.0
    %54 = vmatpush.msra.mxu0 0.0
    %55 = vmatpush.msra.mxu0 0.0
    %56 = vmatpush.msra.mxu0 0.0
    %57 = vmatpush.msra.mxu0 0.0
    %58 = vmatpush.msra.mxu0 %v41
    %59 = vmatpush.msra.mxu0 %v40
    %60 = vmatpush.msra.mxu0 %v39
    %61 = vmatpush.msra.mxu0 %v38
    %62 = vmatpush.msra.mxu0 %v37
    %63 = vmatpush.msra.mxu0 %v36
    %64 = vmatpush.msra.mxu0 %v35
    %65 = vmatpush.msra.mxu0 %v34
    %66 = vmatmul.f32.gmra.mxu0 %v48
    %v67 = vpop.f32.mrf.mxu0
    %v68 = vadd.f32 %v44, %v67
    %69 = vdwg.mxu0
    %v70 = vmax.f32 %v68, 0.0
    %v71 = vld [vmem:[%s3] sm:$0xff]
    %v72 = vld [vmem:[%s3 + $0x8] sm:$0xff]
    %v73 = vld [vmem:[%s3 + $0x10] sm:$0xff]
    %v74 = vld [vmem:[%s3 + $0x18] sm:$0xff]
    %v75 = vld [vmem:[%s4] sm:$0x1]
    %v77 = vperm.slane %v75, 0
    %vm79 = vcmask 261120
    %v81 = vsel %vm79, %v70, 0
    %83 = vmatpush.msra.mxu0 0.0
    %84 = vmatpush.msra.mxu0 0.0
    %85 = vmatpush.msra.mxu0 0.0
    %86 = vmatpush.msra.mxu0 0.0
    %87 = vmatpush.msra.mxu0 0.0
    %88 = vmatpush.msra.mxu0 0.0
    %89 = vmatpush.msra.mxu0 0.0
    %90 = vmatpush.msra.mxu0 0.0
    %91 = vmatpush.msra.mxu0 0.0
    %92 = vmatpush.msra.mxu0 0.0
    %93 = vmatpush.msra.mxu0 0.0
    %94 = vmatpush.msra.mxu0 0.0
    %95 = vmatpush.msra.mxu0 %v74
    %96 = vmatpush.msra.mxu0 %v73
    %97 = vmatpush.msra.mxu0 %v72
    %98 = vmatpush.msra.mxu0 %v71
    %99 = vmatmul.f32.gmra.mxu0 %v81
    %v100 = vpop.f32.mrf.mxu0
    %v101 = vadd.f32 %v77, %v100
    %102 = vdwg.mxu0
    %v103 = vsub.f32 0.0, %v101
    %v104 = vmul.f32 %v103, 1.442695
    %v105 = vpow.pop %v104
    %v106 = vadd.f32 %v105, 1.0
    %v107 = vrcp.pop %v106
    %v108 = vmul.f32 %v106, %v107
    %v109 = vsub.f32 1.0, %v108
    %v110 = vmul.f32 %v107, %v109
    %v111 = vadd.f32 %v107, %v110
    %vm112 = vweird.f32 %v106
    %vm113 = vweird.f32 %v107
    %vm114 = vmor %vm112, %vm113
    %v115 = vsel %vm114, %v107, %v111
    %v116 = vand.u32 2147483647, %v106
    %vm117 = vcmp.eq.f32.partialorder %v116, 8.507059e+37
    %v118 = vand.u32 %v106, 2147483648
    %v119 = vor.u32 1.1754944e-38, %v118
    %v120 = vsel %vm117, %v119, %v115
    %v121 = vmul.f32 1.0, %v120
    %v122 = vld [vmem:[%s5] sm:$0xff]
    %v123 = vld [vmem:[%s5 + $0x8] sm:$0xff]
    %v124 = vld [vmem:[%s6] sm:$0x1]
    %v126 = vperm.slane %v124, 0
    %vm128 = vcmask 130048
    %v130 = vsel %vm128, %v121, 0
    %132 = vmatpush.msra.mxu0 0.0
    %133 = vmatpush.msra.mxu0 0.0
    %134 = vmatpush.msra.mxu0 0.0
    %135 = vmatpush.msra.mxu0 0.0
    %136 = vmatpush.msra.mxu0 0.0
    %137 = vmatpush.msra.mxu0 0.0
    %138 = vmatpush.msra.mxu0 0.0
    %139 = vmatpush.msra.mxu0 0.0
    %140 = vmatpush.msra.mxu0 0.0
    %141 = vmatpush.msra.mxu0 0.0
    %142 = vmatpush.msra.mxu0 0.0
    %143 = vmatpush.msra.mxu0 0.0
    %144 = vmatpush.msra.mxu0 0.0
    %145 = vmatpush.msra.mxu0 0.0
    %146 = vmatpush.msra.mxu0 %v123
    %147 = vmatpush.msra.mxu0 %v122
    %148 = vmatmul.f32.gmra.mxu0 %v130
    %v149 = vpop.f32.mrf.mxu0
    %v150 = vadd.f32 %v126, %v149
    %151 = vdwg.mxu0
    %v152 = vmax.f32 %v150, 0.0
    %v153 = vld [vmem:[%s7] sm:$0xff]
    %v154 = vld [vmem:[%s7 + $0x8] sm:$0xff]
    %v155 = vld [vmem:[%s7 + $0x10] sm:$0xff]
    %v156 = vld [vmem:[%s7 + $0x18] sm:$0xff]
    %v157 = vld [vmem:[%s8] sm:$0x1]
    %v159 = vperm.slane %v157, 0
    %v162 = vsel %vm79, %v152, 0
    %164 = vmatpush.msra.mxu0 0.0
    %165 = vmatpush.msra.mxu0 0.0
    %166 = vmatpush.msra.mxu0 0.0
    %167 = vmatpush.msra.mxu0 0.0
    %168 = vmatpush.msra.mxu0 0.0
    %169 = vmatpush.msra.mxu0 0.0
    %170 = vmatpush.msra.mxu0 0.0
    %171 = vmatpush.msra.mxu0 0.0
    %172 = vmatpush.msra.mxu0 0.0
    %173 = vmatpush.msra.mxu0 0.0
    %174 = vmatpush.msra.mxu0 0.0
    %175 = vmatpush.msra.mxu0 0.0
    %176 = vmatpush.msra.mxu0 %v156
    %177 = vmatpush.msra.mxu0 %v155
    %178 = vmatpush.msra.mxu0 %v154
    %179 = vmatpush.msra.mxu0 %v153
    %180 = vmatmul.f32.gmra.mxu0 %v162
    %v181 = vpop.f32.mrf.mxu0
    %v182 = vadd.f32 %v159, %v181
    %183 = vdwg.mxu0
    %v184 = vsub.f32 0.0, %v182
    %v185 = vmul.f32 %v184, 1.442695
    %v186 = vpow.pop %v185
    %v187 = vadd.f32 %v186, 1.0
    %v188 = vrcp.pop %v187
    %v189 = vmul.f32 %v187, %v188
    %v190 = vsub.f32 1.0, %v189
    %v191 = vmul.f32 %v188, %v190
    %v192 = vadd.f32 %v188, %v191
    %vm193 = vweird.f32 %v187
    %vm194 = vweird.f32 %v188
    %vm195 = vmor %vm193, %vm194
    %v196 = vsel %vm195, %v188, %v192
    %v197 = vand.u32 2147483647, %v187
    %vm198 = vcmp.eq.f32.partialorder %v197, 8.507059e+37
    %v199 = vand.u32 %v187, 2147483648
    %v200 = vor.u32 1.1754944e-38, %v199
    %v201 = vsel %vm198, %v200, %v196
    %v202 = vmul.f32 1.0, %v201
    %203 = vst.msk [vmem:[#allocation2] sm:$0xff] %vm46, %v202
    // Predicated region
    $region38: #{tpu_custom_call.1} parent=1 // pred_check
      _
    $region39: #{tpu_custom_call.1} parent=1 // pred_check_branch
      %205 = sbr.rel (0) target = $region41
    $region40: #{tpu_custom_call.1} parent=1 // pred_region
      %207 = vsyncadd [#allocation3], 0
      %s209 = sshll.u32 [#allocation2], 4
      %s210 = int_to_ptr.vmem [resolvable:$true] %s209
      %s211 = sshll.u32 %s9, 4
      %s212 = int_to_ptr.hbm [resolvable:$true] %s211
      %214 = dma.vmem_to_hbm [thread:$0]  %s210, 128, %s212, [#allocation3]
    $region41: #{tpu_custom_call.1} parent=1 // pred_fallthru
      _
    // Predicated region
    $region42: #{tpu_custom_call.1} parent=1 // pred_check
      _
    $region43: #{tpu_custom_call.1} parent=1 // pred_check_branch
      %216 = sbr.rel (0) target = $region45
    $region44: #{tpu_custom_call.1} parent=1 // pred_region
      %218 = dma.done [#allocation3], 128
    $region45: #{tpu_custom_call.1} parent=1 // pred_fallthru
      _
    %219 = vsyncpa [#allocation3], 1

</llo_original>
